<compile_context>
chip_gen: v6e
topology: v6e:2x2x1
jax: 0.10.0
libtpu: 0.0.40
codegen_flags: <defaults>
</compile_context>

<pallas_src>
import jax
import jax.numpy as jnp
from jax.experimental import pallas as pl
from jax.experimental.pallas import tpu as pltpu

IN_DIM = 28 * 28
H1 = 64
H2 = 32
OUT_DIM = 10
NEG_SLOPE = 0.01  # nn.LeakyReLU() default
TB_MAX = 1024     # batch tile: ~86% HBM roofline, fits default scoped VMEM everywhere


def _leaky_relu(x):
    return jnp.where(x > 0, x, NEG_SLOPE * x)


def mlp_kernel(x_ref, w1_ref, b1_ref, w2_ref, b2_ref, w3_ref, b3_ref, o_ref):
    # Layer 1: Linear(784 -> 64) + LeakyReLU  (MXU matmul, f32 accumulate).
    x = x_ref[...]
    h1 = jnp.dot(x, w1_ref[...], preferred_element_type=jnp.float32) + b1_ref[...]
    h1 = _leaky_relu(h1)

    # Layer 2: Linear(64 -> 32) + LeakyReLU  (cheap, hidden under the input DMA).
    h2 = jnp.dot(h1, w2_ref[...], preferred_element_type=jnp.float32) + b2_ref[...]
    h2 = _leaky_relu(h2)

    # Layer 3: Linear(32 -> 10)
    logits = jnp.dot(h2, w3_ref[...], preferred_element_type=jnp.float32) + b3_ref[...]

    # LogSoftmax over last axis (numerically stable; exp/log go to the EUP).
    m = jnp.max(logits, axis=-1, keepdims=True)
    lse = m + jnp.log(jnp.sum(jnp.exp(logits - m), axis=-1, keepdims=True))
    o_ref[...] = logits - lse


@jax.jit
def custom_mlp_forward(img, w1, b1, w2, b2, w3, b3):
    # img: (B, 1, 28, 28) NCHW  ->  flatten to (B, 784) like img.reshape(B, -1)
    batch = img.shape[0]
    x = img.reshape(batch, -1).astype(jnp.float32)

    # Batch tile: full batch if it fits, else 1024-row tiles; the last
    # (possibly partial) block is masked by Pallas — no padding copy needed.
    tb = min(batch, TB_MAX)
    grid = (pl.cdiv(batch, tb),)

    # Biases as (1, N) row vectors for clean lane-axis broadcasting.
    b1r = b1.reshape(1, H1)
    b2r = b2.reshape(1, H2)
    b3r = b3.reshape(1, OUT_DIM)

    # Weights/biases: constant index maps -> VMEM-resident across all grid steps.
    const = lambda shape: pl.BlockSpec(shape, lambda i: (0, 0))

    out = pl.pallas_call(
        mlp_kernel,
        out_shape=jax.ShapeDtypeStruct((batch, OUT_DIM), jnp.float32),
        grid=grid,
        in_specs=[
            pl.BlockSpec((tb, IN_DIM), lambda i: (i, 0)),   # x: tiled over batch
            const((IN_DIM, H1)),
            const((1, H1)),
            const((H1, H2)),
            const((1, H2)),
            const((H2, OUT_DIM)),
            const((1, OUT_DIM)),
        ],
        out_specs=pl.BlockSpec((tb, OUT_DIM), lambda i: (i, 0)),
        compiler_params=pltpu.CompilerParams(
            dimension_semantics=("parallel",),
        ),
    )(x, w1, b1r, w2, b2r, w3, b3r)

    return out


def init_params(key):
    """Deterministic parameter init (PyTorch-style uniform(-1/sqrt(fan_in), +))."""
    ks = jax.random.split(key, 6)

    def uniform(k, shape, fan_in):
        bound = 1.0 / jnp.sqrt(fan_in)
        return jax.random.uniform(k, shape, jnp.float32, -bound, bound)

    # Weights stored pre-transposed as (in, out).
    w1 = uniform(ks[0], (IN_DIM, H1), IN_DIM)
    b1 = uniform(ks[1], (H1,), IN_DIM)
    w2 = uniform(ks[2], (H1, H2), H1)
    b2 = uniform(ks[3], (H2,), H1)
    w3 = uniform(ks[4], (H2, OUT_DIM), H2)
    b3 = uniform(ks[5], (OUT_DIM,), H2)
    return w1, b1, w2, b2, w3, b3


def reference_forward(img, w1, b1, w2, b2, w3, b3):
    """Pure-JAX reference matching the PyTorch forward pass."""
    x = img.reshape(img.shape[0], -1).astype(jnp.float32)
    h1 = _leaky_relu(x @ w1 + b1)
    h2 = _leaky_relu(h1 @ w2 + b2)
    logits = h2 @ w3 + b3
    return jax.nn.log_softmax(logits, axis=-1)


if __name__ == "__main__":
    key = jax.random.PRNGKey(0)
    pkey, xkey, xkey2 = jax.random.split(key, 3)

    params = init_params(pkey)

    # Small MNIST-like NCHW input (batch=2): single grid step, block == full batch.
    img = jax.random.normal(xkey, (2, 1, 28, 28), dtype=jnp.float32)
    out = jax.block_until_ready(custom_mlp_forward(img, *params))
    ref = reference_forward(img, *params)
    assert out.shape == (2, OUT_DIM)
    assert jnp.allclose(out, ref, atol=1e-4, rtol=1e-4), "mismatch vs reference (B=2)"

    # Larger, non-divisible batch: multi-step pipelined grid + masked boundary block.
    img2 = jax.random.normal(xkey2, (2050, 1, 28, 28), dtype=jnp.float32)
    out2 = jax.block_until_ready(custom_mlp_forward(img2, *params))
    ref2 = reference_forward(img2, *params)
    assert out2.shape == (2050, OUT_DIM)
    assert jnp.allclose(out2, ref2, atol=1e-4, rtol=1e-4), "mismatch vs reference (B=2050)"

    print("KERNEL_OK")
</pallas_src>

<mosaic_0001>
module attributes {stable_mosaic.version = 11 : i64} {
  func.func @mlp_kernel(%arg0: i32, %arg1: memref<2x784xf32, #tpu.memory_space<vmem>>, %arg2: memref<784x64xf32, #tpu.memory_space<vmem>>, %arg3: memref<1x64xf32, #tpu.memory_space<vmem>>, %arg4: memref<64x32xf32, #tpu.memory_space<vmem>>, %arg5: memref<1x32xf32, #tpu.memory_space<vmem>>, %arg6: memref<32x10xf32, #tpu.memory_space<vmem>>, %arg7: memref<1x10xf32, #tpu.memory_space<vmem>>, %arg8: memref<2x10xf32, #tpu.memory_space<vmem>>) attributes {dimension_semantics = [#tpu.dimension_semantics<parallel>], iteration_bounds = array<i64: 1>, scalar_prefetch = 0 : i64, scratch_operands = 0 : i64, tpu.core_type = #tpu.core_type<tc>, window_params = [{transform_indices = @transform_0, window_bounds = array<i64: 2, 784>}, {pipeline_mode = #tpu.pipeline_mode<synchronous>, transform_indices = @transform_1, window_bounds = array<i64: 784, 64>}, {pipeline_mode = #tpu.pipeline_mode<synchronous>, transform_indices = @transform_2, window_bounds = array<i64: 1, 64>}, {pipeline_mode = #tpu.pipeline_mode<synchronous>, transform_indices = @transform_3, window_bounds = array<i64: 64, 32>}, {pipeline_mode = #tpu.pipeline_mode<synchronous>, transform_indices = @transform_4, window_bounds = array<i64: 1, 32>}, {pipeline_mode = #tpu.pipeline_mode<synchronous>, transform_indices = @transform_5, window_bounds = array<i64: 32, 10>}, {pipeline_mode = #tpu.pipeline_mode<synchronous>, transform_indices = @transform_6, window_bounds = array<i64: 1, 10>}, {transform_indices = @transform_7, window_bounds = array<i64: 2, 10>}]} {
    %c0 = arith.constant 0 : index
    %c0_0 = arith.constant 0 : index
    %0 = vector.load %arg1[%c0, %c0_0] : memref<2x784xf32, #tpu.memory_space<vmem>>, vector<2x784xf32>
    %c0_1 = arith.constant 0 : index
    %c0_2 = arith.constant 0 : index
    %1 = vector.load %arg2[%c0_1, %c0_2] : memref<784x64xf32, #tpu.memory_space<vmem>>, vector<784x64xf32>
    %cst = arith.constant dense<0.000000e+00> : vector<2x64xf32>
    %2 = tpu.matmul %0, %1, %cst {dimension_numbers = #tpu.dot_dimension_numbers<[1], [0], [0], [1], [0, 0, 1, 1], [], []>} : vector<2x784xf32>, vector<784x64xf32>, vector<2x64xf32> -> vector<2x64xf32>
    %c0_3 = arith.constant 0 : index
    %c0_4 = arith.constant 0 : index
    %3 = vector.load %arg3[%c0_3, %c0_4] : memref<1x64xf32, #tpu.memory_space<vmem>>, vector<1x64xf32>
    %4 = vector.broadcast %3 : vector<1x64xf32> to vector<2x64xf32>
    %5 = arith.addf %2, %4 : vector<2x64xf32>
    %cst_5 = arith.constant 0.000000e+00 : f32
    %6 = vector.broadcast %cst_5 : f32 to vector<2x64xf32>
    %7 = arith.cmpf ogt, %5, %6 : vector<2x64xf32>
    %cst_6 = arith.constant 0.00999999977 : f32
    %8 = vector.broadcast %cst_6 : f32 to vector<2x64xf32>
    %9 = arith.mulf %8, %5 : vector<2x64xf32>
    %10 = arith.select %7, %5, %9 : vector<2x64xi1>, vector<2x64xf32>
    %c0_7 = arith.constant 0 : index
    %c0_8 = arith.constant 0 : index
    %11 = vector.load %arg4[%c0_7, %c0_8] : memref<64x32xf32, #tpu.memory_space<vmem>>, vector<64x32xf32>
    %cst_9 = arith.constant dense<0.000000e+00> : vector<2x32xf32>
    %12 = tpu.matmul %10, %11, %cst_9 {dimension_numbers = #tpu.dot_dimension_numbers<[1], [0], [0], [1], [0, 0, 1, 1], [], []>} : vector<2x64xf32>, vector<64x32xf32>, vector<2x32xf32> -> vector<2x32xf32>
    %c0_10 = arith.constant 0 : index
    %c0_11 = arith.constant 0 : index
    %13 = vector.load %arg5[%c0_10, %c0_11] : memref<1x32xf32, #tpu.memory_space<vmem>>, vector<1x32xf32>
    %14 = vector.broadcast %13 : vector<1x32xf32> to vector<2x32xf32>
    %15 = arith.addf %12, %14 : vector<2x32xf32>
    %cst_12 = arith.constant 0.000000e+00 : f32
    %16 = vector.broadcast %cst_12 : f32 to vector<2x32xf32>
    %17 = arith.cmpf ogt, %15, %16 : vector<2x32xf32>
    %cst_13 = arith.constant 0.00999999977 : f32
    %18 = vector.broadcast %cst_13 : f32 to vector<2x32xf32>
    %19 = arith.mulf %18, %15 : vector<2x32xf32>
    %20 = arith.select %17, %15, %19 : vector<2x32xi1>, vector<2x32xf32>
    %c0_14 = arith.constant 0 : index
    %c0_15 = arith.constant 0 : index
    %21 = vector.load %arg6[%c0_14, %c0_15] : memref<32x10xf32, #tpu.memory_space<vmem>>, vector<32x10xf32>
    %cst_16 = arith.constant dense<0.000000e+00> : vector<2x10xf32>
    %22 = tpu.matmul %20, %21, %cst_16 {dimension_numbers = #tpu.dot_dimension_numbers<[1], [0], [0], [1], [0, 0, 1, 1], [], []>} : vector<2x32xf32>, vector<32x10xf32>, vector<2x10xf32> -> vector<2x10xf32>
    %c0_17 = arith.constant 0 : index
    %c0_18 = arith.constant 0 : index
    %23 = vector.load %arg7[%c0_17, %c0_18] : memref<1x10xf32, #tpu.memory_space<vmem>>, vector<1x10xf32>
    %24 = vector.broadcast %23 : vector<1x10xf32> to vector<2x10xf32>
    %25 = arith.addf %22, %24 : vector<2x10xf32>
    %cst_19 = arith.constant dense<0xFF800000> : vector<2xf32>
    %26 = vector.multi_reduction <maximumf>, %25, %cst_19 [1] : vector<2x10xf32> to vector<2xf32>
    %27 = vector.shape_cast %26 : vector<2xf32> to vector<2x1xf32>
    %28 = vector.broadcast %27 : vector<2x1xf32> to vector<2x10xf32>
    %29 = arith.subf %25, %28 : vector<2x10xf32>
    %30 = math.exp %29 : vector<2x10xf32>
    %cst_20 = arith.constant dense<0.000000e+00> : vector<2xf32>
    %31 = vector.multi_reduction <add>, %30, %cst_20 [1] : vector<2x10xf32> to vector<2xf32>
    %32 = vector.shape_cast %31 : vector<2xf32> to vector<2x1xf32>
    %33 = math.log %32 : vector<2x1xf32>
    %34 = arith.addf %27, %33 : vector<2x1xf32>
    %35 = vector.broadcast %34 : vector<2x1xf32> to vector<2x10xf32>
    %36 = arith.subf %25, %35 : vector<2x10xf32>
    %c0_21 = arith.constant 0 : index
    %c0_22 = arith.constant 0 : index
    %37 = vector.load %arg8[%c0_21, %c0_22] : memref<2x10xf32, #tpu.memory_space<vmem>>, vector<2x10xf32>
    tpu.vector_store %arg8[%c0_21, %c0_22], %36 {strides = array<i32>} : memref<2x10xf32, #tpu.memory_space<vmem>>, vector<2x10xf32>,
    return
  }
  func.func @transform_0(%arg0: i32) -> (i32, i32) {
    %c0_i32 = arith.constant 0 : i32
    %c0_i32_0 = arith.constant 0 : i32
    return %arg0, %c0_i32 : i32, i32
  }
  func.func @transform_1(%arg0: i32) -> (i32, i32) {
    %c0_i32 = arith.constant 0 : i32
    %c0_i32_0 = arith.constant 0 : i32
    %c0_i32_1 = arith.constant 0 : i32
    return %c0_i32, %c0_i32_0 : i32, i32
  }
  func.func @transform_2(%arg0: i32) -> (i32, i32) {
    %c0_i32 = arith.constant 0 : i32
    %c0_i32_0 = arith.constant 0 : i32
    %c0_i32_1 = arith.constant 0 : i32
    return %c0_i32, %c0_i32_0 : i32, i32
  }
  func.func @transform_3(%arg0: i32) -> (i32, i32) {
    %c0_i32 = arith.constant 0 : i32
    %c0_i32_0 = arith.constant 0 : i32
    %c0_i32_1 = arith.constant 0 : i32
    return %c0_i32, %c0_i32_0 : i32, i32
  }
  func.func @transform_4(%arg0: i32) -> (i32, i32) {
    %c0_i32 = arith.constant 0 : i32
    %c0_i32_0 = arith.constant 0 : i32
    %c0_i32_1 = arith.constant 0 : i32
    return %c0_i32, %c0_i32_0 : i32, i32
  }
  func.func @transform_5(%arg0: i32) -> (i32, i32) {
    %c0_i32 = arith.constant 0 : i32
    %c0_i32_0 = arith.constant 0 : i32
    %c0_i32_1 = arith.constant 0 : i32
    return %c0_i32, %c0_i32_0 : i32, i32
  }
  func.func @transform_6(%arg0: i32) -> (i32, i32) {
    %c0_i32 = arith.constant 0 : i32
    %c0_i32_0 = arith.constant 0 : i32
    %c0_i32_1 = arith.constant 0 : i32
    return %c0_i32, %c0_i32_0 : i32, i32
  }
  func.func @transform_7(%arg0: i32) -> (i32, i32) {
    %c0_i32 = arith.constant 0 : i32
    %c0_i32_0 = arith.constant 0 : i32
    return %arg0, %c0_i32 : i32, i32
  }
}

</mosaic_0001>

<llo_original>
// kernel: custom_mlp_forward.1
$region0: #{custom_mlp_forward.1}
  #allocation0 [shape = 'u32[]', space=smem, size = 0x4, offset = 0x4, fixed_abs, tag = 'smem constant byte address 0x4 - core index']
  #allocation1 [shape = 'u32[144,128]{1,0:T(1,128)}', space=vmem, size = 0x12000, scoped, tag = 'internal scratch']
  %s0 = inlined_call_operand.vmem [shape: f32[2,784], index: 0, kind: input, shape index: {}]
  %s1 = inlined_call_operand.vmem [shape: f32[784,64], index: 1, kind: input, shape index: {}]
  %s2 = inlined_call_operand.vmem [shape: f32[1,64], index: 2, kind: input, shape index: {}]
  %s3 = inlined_call_operand.vmem [shape: f32[64,32], index: 3, kind: input, shape index: {}]
  %s4 = inlined_call_operand.vmem [shape: f32[1,32], index: 4, kind: input, shape index: {}]
  %s5 = inlined_call_operand.vmem [shape: f32[32,10], index: 5, kind: input, shape index: {}]
  %s6 = inlined_call_operand.vmem [shape: f32[1,10], index: 6, kind: input, shape index: {}]
  %s7 = inlined_call_operand.hbm [shape: f32[2,10], index: 7, kind: output, shape index: {}]
  %s8 = sld [smem:[#allocation0]]
  $region38: #{custom_mlp_forward.1} parent=0
    _
  %s10 = ssub.s32 1, %s8
  %s11 = scalar_select 0, %s10, %s8
  $region1: #{custom_mlp_forward.1} parent=0
    #allocation2 [shape = 'u8[1024]{0}', space=vmem, size = 0x400, scoped, tag = 'output window, operand 0, single buffered']
    #allocation3 [shape = 's32[1]{0}', space=sflag, size = 0x4, scoped, tag = 'scoped memory for custom_mlp_forward.1']
    %12 = vsyncpa [#allocation3], 0
    // Predicated region
    $region2: #{custom_mlp_forward.1} parent=1 // pred_check
      _
    $region3: #{custom_mlp_forward.1} parent=1 // pred_check_branch
      %14 = sbr.rel (0) target = $region5
    $region4: #{custom_mlp_forward.1} parent=1 // pred_region
      _
    $region5: #{custom_mlp_forward.1} parent=1 // pred_fallthru
      _
    // Predicated region
    $region6: #{custom_mlp_forward.1} parent=1 // pred_check
      _
    $region7: #{custom_mlp_forward.1} parent=1 // pred_check_branch
      %16 = sbr.rel (0) target = $region9
    $region8: #{custom_mlp_forward.1} parent=1 // pred_region
      _
    $region9: #{custom_mlp_forward.1} parent=1 // pred_fallthru
      _
    // Predicated region
    $region10: #{custom_mlp_forward.1} parent=1 // pred_check
      _
    $region11: #{custom_mlp_forward.1} parent=1 // pred_check_branch
      %18 = sbr.rel (0) target = $region13
    $region12: #{custom_mlp_forward.1} parent=1 // pred_region
      _
    $region13: #{custom_mlp_forward.1} parent=1 // pred_fallthru
      _
    // Predicated region
    $region14: #{custom_mlp_forward.1} parent=1 // pred_check
      _
    $region15: #{custom_mlp_forward.1} parent=1 // pred_check_branch
      %20 = sbr.rel (0) target = $region17
    $region16: #{custom_mlp_forward.1} parent=1 // pred_region
      _
    $region17: #{custom_mlp_forward.1} parent=1 // pred_fallthru
      _
    // Predicated region
    $region18: #{custom_mlp_forward.1} parent=1 // pred_check
      _
    $region19: #{custom_mlp_forward.1} parent=1 // pred_check_branch
      %22 = sbr.rel (0) target = $region21
    $region20: #{custom_mlp_forward.1} parent=1 // pred_region
      _
    $region21: #{custom_mlp_forward.1} parent=1 // pred_fallthru
      _
    // Predicated region
    $region22: #{custom_mlp_forward.1} parent=1 // pred_check
      _
    $region23: #{custom_mlp_forward.1} parent=1 // pred_check_branch
      %24 = sbr.rel (0) target = $region25
    $region24: #{custom_mlp_forward.1} parent=1 // pred_region
      _
    $region25: #{custom_mlp_forward.1} parent=1 // pred_fallthru
      _
    // Predicated region
    $region26: #{custom_mlp_forward.1} parent=1 // pred_check
      _
    $region27: #{custom_mlp_forward.1} parent=1 // pred_check_branch
      %26 = sbr.rel (0) target = $region29
    $region28: #{custom_mlp_forward.1} parent=1 // pred_region
      _
    $region29: #{custom_mlp_forward.1} parent=1 // pred_fallthru
      _
    %v27 = vld [vmem:[%s0] sm:$0xff]
    %v28 = vld [vmem:[%s0 + $0x8] sm:$0x3f]
    %v29 = vld [vmem:[%s1] sm:$0xff]
    %v30 = vld [vmem:[%s1 + $0x8] sm:$0xff]
    %v31 = vld [vmem:[%s1 + $0x10] sm:$0xff]
    %v32 = vld [vmem:[%s1 + $0x18] sm:$0xff]
    %v33 = vld [vmem:[%s1 + $0x20] sm:$0xff]
    %v34 = vld [vmem:[%s1 + $0x28] sm:$0xff]
    %v35 = vld [vmem:[%s1 + $0x30] sm:$0xff]
    %v36 = vld [vmem:[%s1 + $0x38] sm:$0xff]
    %v37 = vld [vmem:[%s1 + $0x40] sm:$0xff]
    %v38 = vld [vmem:[%s1 + $0x48] sm:$0xff]
    %v39 = vld [vmem:[%s1 + $0x50] sm:$0xff]
    %v40 = vld [vmem:[%s1 + $0x58] sm:$0xff]
    %v41 = vld [vmem:[%s1 + $0x60] sm:$0xff]
    %v42 = vld [vmem:[%s1 + $0x68] sm:$0xff]
    %v43 = vld [vmem:[%s1 + $0x70] sm:$0xff]
    %v44 = vld [vmem:[%s1 + $0x78] sm:$0xff]
    %v45 = vld [vmem:[%s1 + $0x80] sm:$0xff]
    %v46 = vld [vmem:[%s1 + $0x88] sm:$0xff]
    %v47 = vld [vmem:[%s1 + $0x90] sm:$0xff]
    %v48 = vld [vmem:[%s1 + $0x98] sm:$0xff]
    %v49 = vld [vmem:[%s1 + $0xa0] sm:$0xff]
    %v50 = vld [vmem:[%s1 + $0xa8] sm:$0xff]
    %v51 = vld [vmem:[%s1 + $0xb0] sm:$0xff]
    %v52 = vld [vmem:[%s1 + $0xb8] sm:$0xff]
    %v53 = vld [vmem:[%s1 + $0xc0] sm:$0xff]
    %v54 = vld [vmem:[%s1 + $0xc8] sm:$0xff]
    %v55 = vld [vmem:[%s1 + $0xd0] sm:$0xff]
    %v56 = vld [vmem:[%s1 + $0xd8] sm:$0xff]
    %v57 = vld [vmem:[%s1 + $0xe0] sm:$0xff]
    %v58 = vld [vmem:[%s1 + $0xe8] sm:$0xff]
    %v59 = vld [vmem:[%s1 + $0xf0] sm:$0xff]
    %v60 = vld [vmem:[%s1 + $0xf8] sm:$0xff]
    %v61 = vld [vmem:[%s1 + $0x100] sm:$0xff]
    %v62 = vld [vmem:[%s1 + $0x108] sm:$0xff]
    %v63 = vld [vmem:[%s1 + $0x110] sm:$0xff]
    %v64 = vld [vmem:[%s1 + $0x118] sm:$0xff]
    %v65 = vld [vmem:[%s1 + $0x120] sm:$0xff]
    %v66 = vld [vmem:[%s1 + $0x128] sm:$0xff]
    %v67 = vld [vmem:[%s1 + $0x130] sm:$0xff]
    %v68 = vld [vmem:[%s1 + $0x138] sm:$0xff]
    %v69 = vld [vmem:[%s1 + $0x140] sm:$0xff]
    %v70 = vld [vmem:[%s1 + $0x148] sm:$0xff]
    %v71 = vld [vmem:[%s1 + $0x150] sm:$0xff]
    %v72 = vld [vmem:[%s1 + $0x158] sm:$0xff]
    %v73 = vld [vmem:[%s1 + $0x160] sm:$0xff]
    %v74 = vld [vmem:[%s1 + $0x168] sm:$0xff]
    %v75 = vld [vmem:[%s1 + $0x170] sm:$0xff]
    %v76 = vld [vmem:[%s1 + $0x178] sm:$0xff]
    %v77 = vld [vmem:[%s1 + $0x180] sm:$0xff]
    %v78 = vld [vmem:[%s1 + $0x188] sm:$0xff]
    %v79 = vld [vmem:[%s1 + $0x190] sm:$0xff]
    %v80 = vld [vmem:[%s1 + $0x198] sm:$0xff]
    %v81 = vld [vmem:[%s1 + $0x1a0] sm:$0xff]
    %v82 = vld [vmem:[%s1 + $0x1a8] sm:$0xff]
    %v83 = vld [vmem:[%s1 + $0x1b0] sm:$0xff]
    %v84 = vld [vmem:[%s1 + $0x1b8] sm:$0xff]
    %v85 = vld [vmem:[%s1 + $0x1c0] sm:$0xff]
    %v86 = vld [vmem:[%s1 + $0x1c8] sm:$0xff]
    %v87 = vld [vmem:[%s1 + $0x1d0] sm:$0xff]
    %v88 = vld [vmem:[%s1 + $0x1d8] sm:$0xff]
    %v89 = vld [vmem:[%s1 + $0x1e0] sm:$0xff]
    %v90 = vld [vmem:[%s1 + $0x1e8] sm:$0xff]
    %v91 = vld [vmem:[%s1 + $0x1f0] sm:$0xff]
    %v92 = vld [vmem:[%s1 + $0x1f8] sm:$0xff]
    %v93 = vld [vmem:[%s1 + $0x200] sm:$0xff]
    %v94 = vld [vmem:[%s1 + $0x208] sm:$0xff]
    %v95 = vld [vmem:[%s1 + $0x210] sm:$0xff]
    %v96 = vld [vmem:[%s1 + $0x218] sm:$0xff]
    %v97 = vld [vmem:[%s1 + $0x220] sm:$0xff]
    %v98 = vld [vmem:[%s1 + $0x228] sm:$0xff]
    %v99 = vld [vmem:[%s1 + $0x230] sm:$0xff]
    %v100 = vld [vmem:[%s1 + $0x238] sm:$0xff]
    %v101 = vld [vmem:[%s1 + $0x240] sm:$0xff]
    %v102 = vld [vmem:[%s1 + $0x248] sm:$0xff]
    %v103 = vld [vmem:[%s1 + $0x250] sm:$0xff]
    %v104 = vld [vmem:[%s1 + $0x258] sm:$0xff]
    %v105 = vld [vmem:[%s1 + $0x260] sm:$0xff]
    %v106 = vld [vmem:[%s1 + $0x268] sm:$0xff]
    %v107 = vld [vmem:[%s1 + $0x270] sm:$0xff]
    %v108 = vld [vmem:[%s1 + $0x278] sm:$0xff]
    %v109 = vld [vmem:[%s1 + $0x280] sm:$0xff]
    %v110 = vld [vmem:[%s1 + $0x288] sm:$0xff]
    %v111 = vld [vmem:[%s1 + $0x290] sm:$0xff]
    %v112 = vld [vmem:[%s1 + $0x298] sm:$0xff]
    %v113 = vld [vmem:[%s1 + $0x2a0] sm:$0xff]
    %v114 = vld [vmem:[%s1 + $0x2a8] sm:$0xff]
    %v115 = vld [vmem:[%s1 + $0x2b0] sm:$0xff]
    %v116 = vld [vmem:[%s1 + $0x2b8] sm:$0xff]
    %v117 = vld [vmem:[%s1 + $0x2c0] sm:$0xff]
    %v118 = vld [vmem:[%s1 + $0x2c8] sm:$0xff]
    %v119 = vld [vmem:[%s1 + $0x2d0] sm:$0xff]
    %v120 = vld [vmem:[%s1 + $0x2d8] sm:$0xff]
    %v121 = vld [vmem:[%s1 + $0x2e0] sm:$0xff]
    %v122 = vld [vmem:[%s1 + $0x2e8] sm:$0xff]
    %v123 = vld [vmem:[%s1 + $0x2f0] sm:$0xff]
    %v124 = vld [vmem:[%s1 + $0x2f8] sm:$0xff]
    %v125 = vld [vmem:[%s1 + $0x300] sm:$0xff]
    %v126 = vld [vmem:[%s1 + $0x308] sm:$0xff]
    %v127 = vld [vmem:[%s2] sm:$0x1]
    %v129 = vlaneseq
    %v130 = vshrl.u32 %v129, 7
    %v131 = vsub.s32 0, %v130
    %v132 = vrot.slane %v127, %v131
    %v136 = vcombine.high %v27, %v27
    %v138 = vunpack.c.l.s4 1983009808
    %v139 = vunpack.c.0.s8 %v138
    %v140 = vlaneseq
    %v141 = vshrl.u32 %v140, 7
    %v142 = vsub.s32 %v139, %v141
    %v143 = vrot.slane %v27, %v142
    %v145 = vunpack.c.l.s4 1983009808
    %v146 = vunpack.c.0.s8 %v145
    %v147 = vlaneseq
    %v148 = vshrl.u32 %v147, 7
    %v149 = vsub.s32 %v146, %v148
    %v150 = vrot.slane %v136, %v149
    %v151 = vcombine.high %v143, %v143
    %v152 = vcombine.high %v150, %v150
    %v153 = vcombine.high %v28, %v28
    %v155 = vunpack.c.l.s4 1983009808
    %v156 = vunpack.c.0.s8 %v155
    %v157 = vlaneseq
    %v158 = vshrl.u32 %v157, 7
    %v159 = vsub.s32 %v156, %v158
    %v160 = vrot.slane %v28, %v159
    %v162 = vunpack.c.l.s4 1983009808
    %v163 = vunpack.c.0.s8 %v162
    %v164 = vlaneseq
    %v165 = vshrl.u32 %v164, 7
    %v166 = vsub.s32 %v163, %v165
    %v167 = vrot.slane %v153, %v166
    %v168 = vcombine.high %v160, %v160
    %vm175 = vcmask 130048
    %v176 = vsel %vm175, %v167, 0
    %178 = vmatprep.subr.mxu0 0.0
    %179 = vmatpush1.msra.mxu0 %v44
    %180 = vmatprep.subr.mxu0 0.0
    %181 = vmatpush1.msra.mxu0 %v43
    %182 = vmatprep.subr.mxu0 0.0
    %183 = vmatpush1.msra.mxu0 %v42
    %184 = vmatprep.subr.mxu0 0.0
    %185 = vmatpush1.msra.mxu0 %v41
    %186 = vmatprep.subr.mxu0 0.0
    %187 = vmatpush1.msra.mxu0 %v40
    %188 = vmatprep.subr.mxu0 0.0
    %189 = vmatpush1.msra.mxu0 %v39
    %190 = vmatprep.subr.mxu0 0.0
    %191 = vmatpush1.msra.mxu0 %v38
    %192 = vmatprep.subr.mxu0 0.0
    %193 = vmatpush1.msra.mxu0 %v37
    %194 = vmatprep.subr.mxu0 0.0
    %195 = vmatpush1.msra.mxu0 %v36
    %196 = vmatprep.subr.mxu0 0.0
    %197 = vmatpush1.msra.mxu0 %v35
    %198 = vmatprep.subr.mxu0 0.0
    %199 = vmatpush1.msra.mxu0 %v34
    %200 = vmatprep.subr.mxu0 0.0
    %201 = vmatpush1.msra.mxu0 %v33
    %202 = vmatprep.subr.mxu0 0.0
    %203 = vmatpush1.msra.mxu0 %v32
    %204 = vmatprep.subr.mxu0 0.0
    %205 = vmatpush1.msra.mxu0 %v31
    %206 = vmatprep.subr.mxu0 0.0
    %207 = vmatpush1.msra.mxu0 %v30
    %208 = vmatprep.subr.mxu0 0.0
    %209 = vmatpush1.msra.mxu0 %v29
    %210 = vmatprep.subr.mxu0 0.0
    %211 = vmatpush2.msra.mxu0 %v60
    %212 = vmatprep.subr.mxu0 0.0
    %213 = vmatpush2.msra.mxu0 %v59
    %214 = vmatprep.subr.mxu0 0.0
    %215 = vmatpush2.msra.mxu0 %v58
    %216 = vmatprep.subr.mxu0 0.0
    %217 = vmatpush2.msra.mxu0 %v57
    %218 = vmatprep.subr.mxu0 0.0
    %219 = vmatpush2.msra.mxu0 %v56
    %220 = vmatprep.subr.mxu0 0.0
    %221 = vmatpush2.msra.mxu0 %v55
    %222 = vmatprep.subr.mxu0 0.0
    %223 = vmatpush2.msra.mxu0 %v54
    %224 = vmatprep.subr.mxu0 0.0
    %225 = vmatpush2.msra.mxu0 %v53
    %226 = vmatprep.subr.mxu0 0.0
    %227 = vmatpush2.msra.mxu0 %v52
    %228 = vmatprep.subr.mxu0 0.0
    %229 = vmatpush2.msra.mxu0 %v51
    %230 = vmatprep.subr.mxu0 0.0
    %231 = vmatpush2.msra.mxu0 %v50
    %232 = vmatprep.subr.mxu0 0.0
    %233 = vmatpush2.msra.mxu0 %v49
    %234 = vmatprep.subr.mxu0 0.0
    %235 = vmatpush2.msra.mxu0 %v48
    %236 = vmatprep.subr.mxu0 0.0
    %237 = vmatpush2.msra.mxu0 %v47
    %238 = vmatprep.subr.mxu0 0.0
    %239 = vmatpush2.msra.mxu0 %v46
    %240 = vmatprep.subr.mxu0 0.0
    %241 = vmatpush2.msra.mxu0 %v45
    %242 = vmatprep.mubr.f32.mxu0 %v151
    %243 = vmatmul.mubr.f32.gmra.mxu0 %v143
    %v244 = vpop.f32.mrf.mxu0
    %v245 = vadd.f32 %v132, %v244
    %v246 = vpop.f32.mrf.mxu0
    %247 = vdwg.mxu0
    %248 = vmatprep.subr.mxu0 0.0
    %249 = vmatpush1.msra.mxu0 %v76
    %250 = vmatprep.subr.mxu0 0.0
    %251 = vmatpush1.msra.mxu0 %v75
    %252 = vmatprep.subr.mxu0 0.0
    %253 = vmatpush1.msra.mxu0 %v74
    %254 = vmatprep.subr.mxu0 0.0
    %255 = vmatpush1.msra.mxu0 %v73
    %256 = vmatprep.subr.mxu0 0.0
    %257 = vmatpush1.msra.mxu0 %v72
    %258 = vmatprep.subr.mxu0 0.0
    %259 = vmatpush1.msra.mxu0 %v71
    %260 = vmatprep.subr.mxu0 0.0
    %261 = vmatpush1.msra.mxu0 %v70
    %262 = vmatprep.subr.mxu0 0.0
    %263 = vmatpush1.msra.mxu0 %v69
    %264 = vmatprep.subr.mxu0 0.0
    %265 = vmatpush1.msra.mxu0 %v68
    %266 = vmatprep.subr.mxu0 0.0
    %267 = vmatpush1.msra.mxu0 %v67
    %268 = vmatprep.subr.mxu0 0.0
    %269 = vmatpush1.msra.mxu0 %v66
    %270 = vmatprep.subr.mxu0 0.0
    %271 = vmatpush1.msra.mxu0 %v65
    %272 = vmatprep.subr.mxu0 0.0
    %273 = vmatpush1.msra.mxu0 %v64
    %274 = vmatprep.subr.mxu0 0.0
    %275 = vmatpush1.msra.mxu0 %v63
    %276 = vmatprep.subr.mxu0 0.0
    %277 = vmatpush1.msra.mxu0 %v62
    %278 = vmatprep.subr.mxu0 0.0
    %279 = vmatpush1.msra.mxu0 %v61
    %280 = vmatprep.subr.mxu0 0.0
    %281 = vmatpush2.msra.mxu0 %v92
    %282 = vmatprep.subr.mxu0 0.0
    %283 = vmatpush2.msra.mxu0 %v91
    %284 = vmatprep.subr.mxu0 0.0
    %285 = vmatpush2.msra.mxu0 %v90
    %286 = vmatprep.subr.mxu0 0.0
    %287 = vmatpush2.msra.mxu0 %v89
    %288 = vmatprep.subr.mxu0 0.0
    %289 = vmatpush2.msra.mxu0 %v88
    %290 = vmatprep.subr.mxu0 0.0
    %291 = vmatpush2.msra.mxu0 %v87
    %292 = vmatprep.subr.mxu0 0.0
    %293 = vmatpush2.msra.mxu0 %v86
    %294 = vmatprep.subr.mxu0 0.0
    %295 = vmatpush2.msra.mxu0 %v85
    %296 = vmatprep.subr.mxu0 0.0
    %297 = vmatpush2.msra.mxu0 %v84
    %298 = vmatprep.subr.mxu0 0.0
    %299 = vmatpush2.msra.mxu0 %v83
    %300 = vmatprep.subr.mxu0 0.0
    %301 = vmatpush2.msra.mxu0 %v82
    %302 = vmatprep.subr.mxu0 0.0
    %303 = vmatpush2.msra.mxu0 %v81
    %304 = vmatprep.subr.mxu0 0.0
    %305 = vmatpush2.msra.mxu0 %v80
    %306 = vmatprep.subr.mxu0 0.0
    %307 = vmatpush2.msra.mxu0 %v79
    %308 = vmatprep.subr.mxu0 0.0
    %309 = vmatpush2.msra.mxu0 %v78
    %310 = vmatprep.subr.mxu0 0.0
    %311 = vmatpush2.msra.mxu0 %v77
    %312 = vmatprep.mubr.f32.mxu0 %v152
    %313 = vmatmul.mubr.f32.gmra.mxu0 %v150
    %v314 = vpop.f32.mrf.mxu0
    %v315 = vadd.f32 %v245, %v314
    %v316 = vpop.f32.mrf.mxu0
    %317 = vdwg.mxu0
    %318 = vmatprep.subr.mxu0 0.0
    %319 = vmatpush1.msra.mxu0 %v108
    %320 = vmatprep.subr.mxu0 0.0
    %321 = vmatpush1.msra.mxu0 %v107
    %322 = vmatprep.subr.mxu0 0.0
    %323 = vmatpush1.msra.mxu0 %v106
    %324 = vmatprep.subr.mxu0 0.0
    %325 = vmatpush1.msra.mxu0 %v105
    %326 = vmatprep.subr.mxu0 0.0
    %327 = vmatpush1.msra.mxu0 %v104
    %328 = vmatprep.subr.mxu0 0.0
    %329 = vmatpush1.msra.mxu0 %v103
    %330 = vmatprep.subr.mxu0 0.0
    %331 = vmatpush1.msra.mxu0 %v102
    %332 = vmatprep.subr.mxu0 0.0
    %333 = vmatpush1.msra.mxu0 %v101
    %334 = vmatprep.subr.mxu0 0.0
    %335 = vmatpush1.msra.mxu0 %v100
    %336 = vmatprep.subr.mxu0 0.0
    %337 = vmatpush1.msra.mxu0 %v99
    %338 = vmatprep.subr.mxu0 0.0
    %339 = vmatpush1.msra.mxu0 %v98
    %340 = vmatprep.subr.mxu0 0.0
    %341 = vmatpush1.msra.mxu0 %v97
    %342 = vmatprep.subr.mxu0 0.0
    %343 = vmatpush1.msra.mxu0 %v96
    %344 = vmatprep.subr.mxu0 0.0
    %345 = vmatpush1.msra.mxu0 %v95
    %346 = vmatprep.subr.mxu0 0.0
    %347 = vmatpush1.msra.mxu0 %v94
    %348 = vmatprep.subr.mxu0 0.0
    %349 = vmatpush1.msra.mxu0 %v93
    %350 = vmatprep.subr.mxu0 0.0
    %351 = vmatpush2.msra.mxu0 %v124
    %352 = vmatprep.subr.mxu0 0.0
    %353 = vmatpush2.msra.mxu0 %v123
    %354 = vmatprep.subr.mxu0 0.0
    %355 = vmatpush2.msra.mxu0 %v122
    %356 = vmatprep.subr.mxu0 0.0
    %357 = vmatpush2.msra.mxu0 %v121
    %358 = vmatprep.subr.mxu0 0.0
    %359 = vmatpush2.msra.mxu0 %v120
    %360 = vmatprep.subr.mxu0 0.0
    %361 = vmatpush2.msra.mxu0 %v119
    %362 = vmatprep.subr.mxu0 0.0
    %363 = vmatpush2.msra.mxu0 %v118
    %364 = vmatprep.subr.mxu0 0.0
    %365 = vmatpush2.msra.mxu0 %v117
    %366 = vmatprep.subr.mxu0 0.0
    %367 = vmatpush2.msra.mxu0 %v116
    %368 = vmatprep.subr.mxu0 0.0
    %369 = vmatpush2.msra.mxu0 %v115
    %370 = vmatprep.subr.mxu0 0.0
    %371 = vmatpush2.msra.mxu0 %v114
    %372 = vmatprep.subr.mxu0 0.0
    %373 = vmatpush2.msra.mxu0 %v113
    %374 = vmatprep.subr.mxu0 0.0
    %375 = vmatpush2.msra.mxu0 %v112
    %376 = vmatprep.subr.mxu0 0.0
    %377 = vmatpush2.msra.mxu0 %v111
    %378 = vmatprep.subr.mxu0 0.0
    %379 = vmatpush2.msra.mxu0 %v110
    %380 = vmatprep.subr.mxu0 0.0
    %381 = vmatpush2.msra.mxu0 %v109
    %382 = vmatprep.mubr.f32.mxu0 %v168
    %383 = vmatmul.mubr.f32.gmra.mxu0 %v160
    %v384 = vpop.f32.mrf.mxu0
    %v385 = vadd.f32 %v315, %v384
    %v386 = vpop.f32.mrf.mxu0
    %387 = vdwg.mxu0
    %388 = vmatprep.subr.mxu0 0.0
    %389 = vmatpush1.msra.mxu0 0.0
    %390 = vmatprep.subr.mxu0 0.0
    %391 = vmatpush1.msra.mxu0 0.0
    %392 = vmatprep.subr.mxu0 0.0
    %393 = vmatpush1.msra.mxu0 0.0
    %394 = vmatprep.subr.mxu0 0.0
    %395 = vmatpush1.msra.mxu0 0.0
    %396 = vmatprep.subr.mxu0 0.0
    %397 = vmatpush1.msra.mxu0 0.0
    %398 = vmatprep.subr.mxu0 0.0
    %399 = vmatpush1.msra.mxu0 0.0
    %400 = vmatprep.subr.mxu0 0.0
    %401 = vmatpush1.msra.mxu0 0.0
    %402 = vmatprep.subr.mxu0 0.0
    %403 = vmatpush1.msra.mxu0 0.0
    %404 = vmatprep.subr.mxu0 0.0
    %405 = vmatpush1.msra.mxu0 0.0
    %406 = vmatprep.subr.mxu0 0.0
    %407 = vmatpush1.msra.mxu0 0.0
    %408 = vmatprep.subr.mxu0 0.0
    %409 = vmatpush1.msra.mxu0 0.0
    %410 = vmatprep.subr.mxu0 0.0
    %411 = vmatpush1.msra.mxu0 0.0
    %412 = vmatprep.subr.mxu0 0.0
    %413 = vmatpush1.msra.mxu0 0.0
    %414 = vmatprep.subr.mxu0 0.0
    %415 = vmatpush1.msra.mxu0 0.0
    %416 = vmatprep.subr.mxu0 0.0
    %417 = vmatpush1.msra.mxu0 %v126
    %418 = vmatprep.subr.mxu0 0.0
    %419 = vmatpush1.msra.mxu0 %v125
    %420 = vmatprep.subr.mxu0 0.0
    %421 = vmatpush2.msra.mxu0 0.0
    %422 = vmatprep.subr.mxu0 0.0
    %423 = vmatpush2.msra.mxu0 0.0
    %424 = vmatprep.subr.mxu0 0.0
    %425 = vmatpush2.msra.mxu0 0.0
    %426 = vmatprep.subr.mxu0 0.0
    %427 = vmatpush2.msra.mxu0 0.0
    %428 = vmatprep.subr.mxu0 0.0
    %429 = vmatpush2.msra.mxu0 0.0
    %430 = vmatprep.subr.mxu0 0.0
    %431 = vmatpush2.msra.mxu0 0.0
    %432 = vmatprep.subr.mxu0 0.0
    %433 = vmatpush2.msra.mxu0 0.0
    %434 = vmatprep.subr.mxu0 0.0
    %435 = vmatpush2.msra.mxu0 0.0
    %436 = vmatprep.subr.mxu0 0.0
    %437 = vmatpush2.msra.mxu0 0.0
    %438 = vmatprep.subr.mxu0 0.0
    %439 = vmatpush2.msra.mxu0 0.0
    %440 = vmatprep.subr.mxu0 0.0
    %441 = vmatpush2.msra.mxu0 0.0
    %442 = vmatprep.subr.mxu0 0.0
    %443 = vmatpush2.msra.mxu0 0.0
    %444 = vmatprep.subr.mxu0 0.0
    %445 = vmatpush2.msra.mxu0 0.0
    %446 = vmatprep.subr.mxu0 0.0
    %447 = vmatpush2.msra.mxu0 0.0
    %448 = vmatprep.subr.mxu0 0.0
    %449 = vmatpush2.msra.mxu0 0.0
    %450 = vmatprep.subr.mxu0 0.0
    %451 = vmatpush2.msra.mxu0 0.0
    %452 = vmatprep.mubr.f32.mxu0 0.0
    %453 = vmatmul.mubr.f32.gmra.mxu0 %v176
    %v454 = vpop.f32.mrf.mxu0
    %v455 = vadd.f32 %v385, %v454
    %v456 = vpop.f32.mrf.mxu0
    %457 = vdwg.mxu0
    %vm458 = vcmp.gt.f32.partialorder %v455, 0.0
    %v459 = vmul.f32 %v455, 0.01
    %v460 = vsel %vm458, %v455, %v459
    %v461 = vld [vmem:[%s3] sm:$0xff]
    %v462 = vld [vmem:[%s3 + $0x8] sm:$0xff]
    %v463 = vld [vmem:[%s3 + $0x10] sm:$0xff]
    %v464 = vld [vmem:[%s3 + $0x18] sm:$0xff]
    %v465 = vld [vmem:[%s3 + $0x20] sm:$0xff]
    %v466 = vld [vmem:[%s3 + $0x28] sm:$0xff]
    %v467 = vld [vmem:[%s3 + $0x30] sm:$0xff]
    %v468 = vld [vmem:[%s3 + $0x38] sm:$0xff]
    %v469 = vld [vmem:[%s4] sm:$0x1]
    %v471 = vlaneseq
    %v472 = vshrl.u32 %v471, 7
    %v473 = vsub.s32 0, %v472
    %v474 = vrot.slane %v469, %v473
    %vm476 = vcmask 523264
    %v478 = vsel %vm476, %v460, 0
    %480 = vmatprep.subr.mxu0 0.0
    %481 = vmatpush1.msra.mxu0 0.0
    %482 = vmatprep.subr.mxu0 0.0
    %483 = vmatpush1.msra.mxu0 0.0
    %484 = vmatprep.subr.mxu0 0.0
    %485 = vmatpush1.msra.mxu0 0.0
    %486 = vmatprep.subr.mxu0 0.0
    %487 = vmatpush1.msra.mxu0 0.0
    %488 = vmatprep.subr.mxu0 0.0
    %489 = vmatpush1.msra.mxu0 0.0
    %490 = vmatprep.subr.mxu0 0.0
    %491 = vmatpush1.msra.mxu0 0.0
    %492 = vmatprep.subr.mxu0 0.0
    %493 = vmatpush1.msra.mxu0 0.0
    %494 = vmatprep.subr.mxu0 0.0
    %495 = vmatpush1.msra.mxu0 0.0
    %496 = vmatprep.subr.mxu0 0.0
    %497 = vmatpush1.msra.mxu0 %v468
    %498 = vmatprep.subr.mxu0 0.0
    %499 = vmatpush1.msra.mxu0 %v467
    %500 = vmatprep.subr.mxu0 0.0
    %501 = vmatpush1.msra.mxu0 %v466
    %502 = vmatprep.subr.mxu0 0.0
    %503 = vmatpush1.msra.mxu0 %v465
    %504 = vmatprep.subr.mxu0 0.0
    %505 = vmatpush1.msra.mxu0 %v464
    %506 = vmatprep.subr.mxu0 0.0
    %507 = vmatpush1.msra.mxu0 %v463
    %508 = vmatprep.subr.mxu0 0.0
    %509 = vmatpush1.msra.mxu0 %v462
    %510 = vmatprep.subr.mxu0 0.0
    %511 = vmatpush1.msra.mxu0 %v461
    %512 = vmatprep.subr.mxu0 0.0
    %513 = vmatpush2.msra.mxu0 0.0
    %514 = vmatprep.subr.mxu0 0.0
    %515 = vmatpush2.msra.mxu0 0.0
    %516 = vmatprep.subr.mxu0 0.0
    %517 = vmatpush2.msra.mxu0 0.0
    %518 = vmatprep.subr.mxu0 0.0
    %519 = vmatpush2.msra.mxu0 0.0
    %520 = vmatprep.subr.mxu0 0.0
    %521 = vmatpush2.msra.mxu0 0.0
    %522 = vmatprep.subr.mxu0 0.0
    %523 = vmatpush2.msra.mxu0 0.0
    %524 = vmatprep.subr.mxu0 0.0
    %525 = vmatpush2.msra.mxu0 0.0
    %526 = vmatprep.subr.mxu0 0.0
    %527 = vmatpush2.msra.mxu0 0.0
    %528 = vmatprep.subr.mxu0 0.0
    %529 = vmatpush2.msra.mxu0 0.0
    %530 = vmatprep.subr.mxu0 0.0
    %531 = vmatpush2.msra.mxu0 0.0
    %532 = vmatprep.subr.mxu0 0.0
    %533 = vmatpush2.msra.mxu0 0.0
    %534 = vmatprep.subr.mxu0 0.0
    %535 = vmatpush2.msra.mxu0 0.0
    %536 = vmatprep.subr.mxu0 0.0
    %537 = vmatpush2.msra.mxu0 0.0
    %538 = vmatprep.subr.mxu0 0.0
    %539 = vmatpush2.msra.mxu0 0.0
    %540 = vmatprep.subr.mxu0 0.0
    %541 = vmatpush2.msra.mxu0 0.0
    %542 = vmatprep.subr.mxu0 0.0
    %543 = vmatpush2.msra.mxu0 0.0
    %544 = vmatprep.mubr.f32.mxu0 0.0
    %545 = vmatmul.mubr.f32.gmra.mxu0 %v478
    %v546 = vpop.f32.mrf.mxu0
    %v547 = vadd.f32 %v474, %v546
    %v548 = vpop.f32.mrf.mxu0
    %549 = vdwg.mxu0
    %vm550 = vcmp.gt.f32.partialorder %v547, 0.0
    %v551 = vmul.f32 %v547, 0.01
    %v552 = vsel %vm550, %v547, %v551
    %v553 = vld [vmem:[%s5] sm:$0xff]
    %v554 = vld [vmem:[%s5 + $0x8] sm:$0xff]
    %v555 = vld [vmem:[%s5 + $0x10] sm:$0xff]
    %v556 = vld [vmem:[%s5 + $0x18] sm:$0xff]
    %v557 = vld [vmem:[%s6] sm:$0x1]
    %v559 = vlaneseq
    %v560 = vshrl.u32 %v559, 7
    %v561 = vsub.s32 0, %v560
    %v562 = vrot.slane %v557, %v561
    %vm564 = vcmask 261120
    %v566 = vsel %vm564, %v552, 0
    %568 = vmatprep.subr.mxu0 0.0
    %569 = vmatpush1.msra.mxu0 0.0
    %570 = vmatprep.subr.mxu0 0.0
    %571 = vmatpush1.msra.mxu0 0.0
    %572 = vmatprep.subr.mxu0 0.0
    %573 = vmatpush1.msra.mxu0 0.0
    %574 = vmatprep.subr.mxu0 0.0
    %575 = vmatpush1.msra.mxu0 0.0
    %576 = vmatprep.subr.mxu0 0.0
    %577 = vmatpush1.msra.mxu0 0.0
    %578 = vmatprep.subr.mxu0 0.0
    %579 = vmatpush1.msra.mxu0 0.0
    %580 = vmatprep.subr.mxu0 0.0
    %581 = vmatpush1.msra.mxu0 0.0
    %582 = vmatprep.subr.mxu0 0.0
    %583 = vmatpush1.msra.mxu0 0.0
    %584 = vmatprep.subr.mxu0 0.0
    %585 = vmatpush1.msra.mxu0 0.0
    %586 = vmatprep.subr.mxu0 0.0
    %587 = vmatpush1.msra.mxu0 0.0
    %588 = vmatprep.subr.mxu0 0.0
    %589 = vmatpush1.msra.mxu0 0.0
    %590 = vmatprep.subr.mxu0 0.0
    %591 = vmatpush1.msra.mxu0 0.0
    %592 = vmatprep.subr.mxu0 0.0
    %593 = vmatpush1.msra.mxu0 %v556
    %594 = vmatprep.subr.mxu0 0.0
    %595 = vmatpush1.msra.mxu0 %v555
    %596 = vmatprep.subr.mxu0 0.0
    %597 = vmatpush1.msra.mxu0 %v554
    %598 = vmatprep.subr.mxu0 0.0
    %599 = vmatpush1.msra.mxu0 %v553
    %600 = vmatprep.subr.mxu0 0.0
    %601 = vmatpush2.msra.mxu0 0.0
    %602 = vmatprep.subr.mxu0 0.0
    %603 = vmatpush2.msra.mxu0 0.0
    %604 = vmatprep.subr.mxu0 0.0
    %605 = vmatpush2.msra.mxu0 0.0
    %606 = vmatprep.subr.mxu0 0.0
    %607 = vmatpush2.msra.mxu0 0.0
    %608 = vmatprep.subr.mxu0 0.0
    %609 = vmatpush2.msra.mxu0 0.0
    %610 = vmatprep.subr.mxu0 0.0
    %611 = vmatpush2.msra.mxu0 0.0
    %612 = vmatprep.subr.mxu0 0.0
    %613 = vmatpush2.msra.mxu0 0.0
    %614 = vmatprep.subr.mxu0 0.0
    %615 = vmatpush2.msra.mxu0 0.0
    %616 = vmatprep.subr.mxu0 0.0
    %617 = vmatpush2.msra.mxu0 0.0
    %618 = vmatprep.subr.mxu0 0.0
    %619 = vmatpush2.msra.mxu0 0.0
    %620 = vmatprep.subr.mxu0 0.0
    %621 = vmatpush2.msra.mxu0 0.0
    %622 = vmatprep.subr.mxu0 0.0
    %623 = vmatpush2.msra.mxu0 0.0
    %624 = vmatprep.subr.mxu0 0.0
    %625 = vmatpush2.msra.mxu0 0.0
    %626 = vmatprep.subr.mxu0 0.0
    %627 = vmatpush2.msra.mxu0 0.0
    %628 = vmatprep.subr.mxu0 0.0
    %629 = vmatpush2.msra.mxu0 0.0
    %630 = vmatprep.subr.mxu0 0.0
    %631 = vmatpush2.msra.mxu0 0.0
    %632 = vmatprep.mubr.f32.mxu0 0.0
    %633 = vmatmul.mubr.f32.gmra.mxu0 %v566
    %v634 = vpop.f32.mrf.mxu0
    %v635 = vadd.f32 %v562, %v634
    %v636 = vpop.f32.mrf.mxu0
    %637 = vdwg.mxu0
    %vm638 = vcmask 74752
    %v639 = vsel %vm638, %v635, -inf
    %640 = vmax.xlane.f32.xlu0 %v639
    %v641 = vpop.xlane.xlu0 %640
    %v642 = vsub.f32 %v635, %v641
    %v643 = vmul.f32 %v642, 1.442695
    %v644 = vpow.pop %v643
    %v645 = vsel %vm638, %v644, 0.0
    %646 = vadd.xlane.f32.xlu0 %v645
    %v647 = vpop.xlane.xlu0 %646
    %v648 = vlog2.pop %v647
    %v649 = vmul.f32 %v648, 0.6931472
    %v650 = vadd.f32 %v641, %v649
    %v651 = vsub.f32 %v635, %v650
    %652 = vst.msk [vmem:[#allocation2] sm:$0x3] %vm638, %v651
    // Predicated region
    $region30: #{custom_mlp_forward.1} parent=1 // pred_check
      _
    $region31: #{custom_mlp_forward.1} parent=1 // pred_check_branch
      %654 = sbr.rel (0) target = $region33
    $region32: #{custom_mlp_forward.1} parent=1 // pred_region
      %s656 = ssub.s32 32, 32
      %657 = vsyncadd [#allocation3], %s656
      %s659 = sshll.u32 [#allocation2], 4
      %s660 = int_to_ptr.vmem [resolvable:$true] %s659
      %662 = dma.vmem_to_hbm [thread:$0]  %s660, 32, %s7, [#allocation3]
    $region33: #{custom_mlp_forward.1} parent=1 // pred_fallthru
      _
    // Predicated region
    $region34: #{custom_mlp_forward.1} parent=1 // pred_check
      _
    $region35: #{custom_mlp_forward.1} parent=1 // pred_check_branch
      %664 = sbr.rel (0) target = $region37
    $region36: #{custom_mlp_forward.1} parent=1 // pred_region
      %665 = dma.done [#allocation3], 32
    $region37: #{custom_mlp_forward.1} parent=1 // pred_fallthru
      _
    %666 = vsyncpa [#allocation3], 1

</llo_original>
